<compile_context>
chip_gen: v7x
topology: tpu7x:2x2x1
jax: 0.10.0
libtpu: 0.0.40
codegen_flags: <defaults>
</compile_context>

<pallas_src>
import jax
import jax.numpy as jnp
from jax.experimental import pallas as pl
from jax.experimental.pallas import tpu as pltpu


def sae_kernel(x_ref, w1_ref, b1_ref, w2_ref, b2_ref,
               w3_ref, b3_ref, w4_ref, b4_ref, o_ref):
    # All four Linear layers + sigmoids fused (MXU for layers 1/4, EUP for exp).
    x = x_ref[...]                                   # native dtype (f32 or bf16)
    # Cast the tiny (NM, 20) weight to x's dtype instead of casting the big
    # (bm, NM) activation tile to f32: avoids an f32 VMEM copy of x and keeps
    # the MXU on its native bf16 path for bf16 inputs (no-op for f32 inputs).
    w1 = w1_ref[...].astype(x.dtype)

    h1 = jnp.dot(x, w1, preferred_element_type=jnp.float32) + b1_ref[...]
    h1 = jax.nn.sigmoid(h1)

    h2 = jnp.dot(h1, w2_ref[...], preferred_element_type=jnp.float32) + b2_ref[...]
    h2 = jax.nn.sigmoid(h2)

    h3 = jnp.dot(h2, w3_ref[...], preferred_element_type=jnp.float32) + b3_ref[...]
    h3 = jax.nn.sigmoid(h3)

    out = jnp.dot(h3, w4_ref[...], preferred_element_type=jnp.float32) + b4_ref[...]
    o_ref[...] = out.astype(o_ref.dtype)


def _round_up(n, m):
    return ((n + m - 1) // m) * m


def _const_spec(shape):
    # Same block every grid step -> single-buffered resident operand, no re-DMA.
    return pl.BlockSpec(shape, lambda i: (0, 0), pipeline_mode=pl.Buffered(1))


def _vmem_limit_bytes():
    # 64 MiB physical VMEM on v7x, 128 MiB on v5e/v6e; keep 25% headroom for
    # the compiler's internal scratch.
    try:
        cap = int(pltpu.get_tpu_info().vmem_capacity_bytes)
    except Exception:
        cap = 64 * 1024 * 1024              # conservative: smallest generation
    return (cap * 3) // 4                   # 48 MiB (v7x) / 96 MiB (v5e, v6e)


def _pick_bm(B, NM, itemsize, vmem_limit):
    """Balanced batch-tile size.

    bm_max is the largest tile whose double-buffered x/out blocks plus f32
    in-kernel temporaries fit in half the per-generation VMEM limit.  Tiles
    are then balanced (n_tiles = cdiv(B, bm_max), bm = round_up(cdiv(B,
    n_tiles), 8)) so the last tile is never mostly padding, and n_tiles >= 2
    (when B is big enough) so the 'parallel' axis shards across v7x's two TCs.
    """
    tile_budget = vmem_limit // 2
    # Per batch row: x + out, each double-buffered, plus ~2 rows of f32
    # in-kernel temporaries (pre-store f32 result etc.).
    bytes_per_row = 4 * NM * itemsize + 2 * NM * 4
    bm_max = int(min(max(tile_budget // bytes_per_row, 8), 2048))
    n_tiles = max(pl.cdiv(B, bm_max), 2 if B >= 16 else 1)
    bm = _round_up(pl.cdiv(B, n_tiles), 8)
    if bm >= B:
        bm = B                              # single block == full batch dim (legal)
    return bm


def sae_forward(x, params, *, bm=None):
    """Fused SAE forward.

    x: (B, nb_movies), f32 or bf16 (bf16 halves HBM traffic on this
       memory-bound kernel; accumulation stays f32 inside).  Output dtype
       matches x (bf16 output differs from PyTorch's f32 — intentional).
    params: w1..w4 stored (in, out), b1..b4 stored (1, out), all f32, used
       as-is — no per-call padding or copies.
    """
    B, NM = x.shape
    io_dtype = x.dtype
    vmem_limit = _vmem_limit_bytes()
    if bm is None:
        bm = _pick_bm(B, NM, jnp.dtype(io_dtype).itemsize, vmem_limit)
    bm = int(min(max(bm, 1), B))

    w1, b1 = params["w1"], params["b1"]
    w2, b2 = params["w2"], params["b2"]
    w3, b3 = params["w3"], params["b3"]
    w4, b4 = params["w4"], params["b4"]

    return pl.pallas_call(
        sae_kernel,
        out_shape=jax.ShapeDtypeStruct((B, NM), io_dtype),
        grid_spec=pltpu.PrefetchScalarGridSpec(
            num_scalar_prefetch=0,
            grid=(pl.cdiv(B, bm),),
            in_specs=[
                # Streamed x tile; last block dim == full array dim (legal even
                # when NM % 128 != 0); ragged last batch tile masked by Pallas.
                pl.BlockSpec((bm, NM), lambda i: (i, 0)),
                _const_spec(w1.shape), _const_spec(b1.shape),
                _const_spec(w2.shape), _const_spec(b2.shape),
                _const_spec(w3.shape), _const_spec(b3.shape),
                _const_spec(w4.shape), _const_spec(b4.shape),
            ],
            out_specs=pl.BlockSpec((bm, NM), lambda i: (i, 0)),
        ),
        compiler_params=pltpu.CompilerParams(
            dimension_semantics=("parallel",),   # batch tiles across TCs (v7x)
            vmem_limit_bytes=int(vmem_limit),
        ),
    )(x, w1, b1, w2, b2, w3, b3, w4, b4)


def init_params(key, nb_movies):
    """Deterministic init mimicking nn.Linear's U(-1/sqrt(in), 1/sqrt(in))."""
    dims = [(nb_movies, 20), (20, 10), (10, 20), (20, nb_movies)]
    params = {}
    keys = jax.random.split(key, 2 * len(dims))
    for idx, (din, dout) in enumerate(dims):
        bound = 1.0 / jnp.sqrt(jnp.float32(din))
        w = jax.random.uniform(keys[2 * idx], (din, dout),
                               minval=-bound, maxval=bound, dtype=jnp.float32)
        b = jax.random.uniform(keys[2 * idx + 1], (1, dout),
                               minval=-bound, maxval=bound, dtype=jnp.float32)
        params[f"w{idx + 1}"] = w
        params[f"b{idx + 1}"] = b
    return params


def sae_reference(x, p):
    h = jax.nn.sigmoid(x @ p["w1"] + p["b1"])
    h = jax.nn.sigmoid(h @ p["w2"] + p["b2"])
    h = jax.nn.sigmoid(h @ p["w3"] + p["b3"])
    return h @ p["w4"] + p["b4"]


def _ratings_like(key, batch, nb_movies):
    k_v, k_m = jax.random.split(key)
    x = jax.random.uniform(k_v, (batch, nb_movies), dtype=jnp.float32) * 5.0
    mask = jax.random.bernoulli(k_m, p=0.1, shape=(batch, nb_movies))
    return jnp.where(mask, x, 0.0)


if __name__ == "__main__":
    # --- Test 1: lane-aligned nb_movies, 2 balanced batch tiles, f32 --------
    nb_movies, batch = 256, 16
    k_x, k_p = jax.random.split(jax.random.PRNGKey(0))
    x = _ratings_like(k_x, batch, nb_movies)
    params = init_params(k_p, nb_movies)

    out = jax.block_until_ready(sae_forward(x, params))
    ref = sae_reference(x, params)
    assert out.shape == (batch, nb_movies)
    assert jnp.allclose(out, ref, atol=1e-4, rtol=1e-4)

    # --- Test 2: non-multiple-of-128 nb_movies, single full-batch block -----
    nb_movies2, batch2 = 200, 10
    k_x2, k_p2 = jax.random.split(jax.random.PRNGKey(1))
    x2 = _ratings_like(k_x2, batch2, nb_movies2)
    params2 = init_params(k_p2, nb_movies2)

    out2 = jax.block_until_ready(sae_forward(x2, params2))
    ref2 = sae_reference(x2, params2)
    assert out2.shape == (batch2, nb_movies2)
    assert jnp.allclose(out2, ref2, atol=1e-4, rtol=1e-4)

    # --- Test 3: ragged last batch tile (B=21 -> bm=16, grid=2, masked rows) -
    batch3 = 21
    x3 = _ratings_like(jax.random.PRNGKey(2), batch3, nb_movies2)
    out3 = jax.block_until_ready(sae_forward(x3, params2))
    ref3 = sae_reference(x3, params2)
    assert out3.shape == (batch3, nb_movies2)
    assert jnp.allclose(out3, ref3, atol=1e-4, rtol=1e-4)

    # --- Test 4: bf16 activation streaming (half HBM traffic), f32 math -----
    out3_bf16 = jax.block_until_ready(sae_forward(x3.astype(jnp.bfloat16), params2))
    assert out3_bf16.dtype == jnp.bfloat16
    assert jnp.allclose(out3_bf16.astype(jnp.float32), ref3, atol=0.15, rtol=0.05)

    print("KERNEL_OK")
</pallas_src>

<mosaic_0001>
module attributes {stable_mosaic.version = 11 : i64} {
  func.func @sae_kernel(%arg0: i32, %arg1: memref<8x256xf32, #tpu.memory_space<vmem>>, %arg2: memref<256x20xf32, #tpu.memory_space<vmem>>, %arg3: memref<1x20xf32, #tpu.memory_space<vmem>>, %arg4: memref<20x10xf32, #tpu.memory_space<vmem>>, %arg5: memref<1x10xf32, #tpu.memory_space<vmem>>, %arg6: memref<10x20xf32, #tpu.memory_space<vmem>>, %arg7: memref<1x20xf32, #tpu.memory_space<vmem>>, %arg8: memref<20x256xf32, #tpu.memory_space<vmem>>, %arg9: memref<1x256xf32, #tpu.memory_space<vmem>>, %arg10: memref<8x256xf32, #tpu.memory_space<vmem>>) attributes {dimension_semantics = [#tpu.dimension_semantics<parallel>], iteration_bounds = array<i64: 2>, scalar_prefetch = 0 : i64, scratch_operands = 0 : i64, tpu.core_type = #tpu.core_type<tc>, window_params = [{transform_indices = @transform_0, window_bounds = array<i64: 8, 256>}, {pipeline_mode = #tpu.pipeline_mode<synchronous>, transform_indices = @transform_1, window_bounds = array<i64: 256, 20>}, {pipeline_mode = #tpu.pipeline_mode<synchronous>, transform_indices = @transform_2, window_bounds = array<i64: 1, 20>}, {pipeline_mode = #tpu.pipeline_mode<synchronous>, transform_indices = @transform_3, window_bounds = array<i64: 20, 10>}, {pipeline_mode = #tpu.pipeline_mode<synchronous>, transform_indices = @transform_4, window_bounds = array<i64: 1, 10>}, {pipeline_mode = #tpu.pipeline_mode<synchronous>, transform_indices = @transform_5, window_bounds = array<i64: 10, 20>}, {pipeline_mode = #tpu.pipeline_mode<synchronous>, transform_indices = @transform_6, window_bounds = array<i64: 1, 20>}, {pipeline_mode = #tpu.pipeline_mode<synchronous>, transform_indices = @transform_7, window_bounds = array<i64: 20, 256>}, {pipeline_mode = #tpu.pipeline_mode<synchronous>, transform_indices = @transform_8, window_bounds = array<i64: 1, 256>}, {transform_indices = @transform_9, window_bounds = array<i64: 8, 256>}]} {
    %c0 = arith.constant 0 : index
    %c0_0 = arith.constant 0 : index
    %0 = vector.load %arg1[%c0, %c0_0] : memref<8x256xf32, #tpu.memory_space<vmem>>, vector<8x256xf32>
    %c0_1 = arith.constant 0 : index
    %c0_2 = arith.constant 0 : index
    %1 = vector.load %arg2[%c0_1, %c0_2] : memref<256x20xf32, #tpu.memory_space<vmem>>, vector<256x20xf32>
    %cst = arith.constant dense<0.000000e+00> : vector<8x20xf32>
    %2 = tpu.matmul %0, %1, %cst {dimension_numbers = #tpu.dot_dimension_numbers<[1], [0], [0], [1], [0, 0, 1, 1], [], []>} : vector<8x256xf32>, vector<256x20xf32>, vector<8x20xf32> -> vector<8x20xf32>
    %c0_3 = arith.constant 0 : index
    %c0_4 = arith.constant 0 : index
    %3 = vector.load %arg3[%c0_3, %c0_4] : memref<1x20xf32, #tpu.memory_space<vmem>>, vector<1x20xf32>
    %4 = vector.broadcast %3 : vector<1x20xf32> to vector<8x20xf32>
    %5 = arith.addf %2, %4 : vector<8x20xf32>
    %6 = arith.negf %5 : vector<8x20xf32>
    %7 = math.exp %6 : vector<8x20xf32>
    %cst_5 = arith.constant 1.000000e+00 : f32
    %8 = vector.broadcast %cst_5 : f32 to vector<8x20xf32>
    %9 = arith.addf %8, %7 : vector<8x20xf32>
    %10 = arith.divf %8, %9 : vector<8x20xf32>
    %c0_6 = arith.constant 0 : index
    %c0_7 = arith.constant 0 : index
    %11 = vector.load %arg4[%c0_6, %c0_7] : memref<20x10xf32, #tpu.memory_space<vmem>>, vector<20x10xf32>
    %cst_8 = arith.constant dense<0.000000e+00> : vector<8x10xf32>
    %12 = tpu.matmul %10, %11, %cst_8 {dimension_numbers = #tpu.dot_dimension_numbers<[1], [0], [0], [1], [0, 0, 1, 1], [], []>} : vector<8x20xf32>, vector<20x10xf32>, vector<8x10xf32> -> vector<8x10xf32>
    %c0_9 = arith.constant 0 : index
    %c0_10 = arith.constant 0 : index
    %13 = vector.load %arg5[%c0_9, %c0_10] : memref<1x10xf32, #tpu.memory_space<vmem>>, vector<1x10xf32>
    %14 = vector.broadcast %13 : vector<1x10xf32> to vector<8x10xf32>
    %15 = arith.addf %12, %14 : vector<8x10xf32>
    %16 = arith.negf %15 : vector<8x10xf32>
    %17 = math.exp %16 : vector<8x10xf32>
    %cst_11 = arith.constant 1.000000e+00 : f32
    %18 = vector.broadcast %cst_11 : f32 to vector<8x10xf32>
    %19 = arith.addf %18, %17 : vector<8x10xf32>
    %20 = arith.divf %18, %19 : vector<8x10xf32>
    %c0_12 = arith.constant 0 : index
    %c0_13 = arith.constant 0 : index
    %21 = vector.load %arg6[%c0_12, %c0_13] : memref<10x20xf32, #tpu.memory_space<vmem>>, vector<10x20xf32>
    %cst_14 = arith.constant dense<0.000000e+00> : vector<8x20xf32>
    %22 = tpu.matmul %20, %21, %cst_14 {dimension_numbers = #tpu.dot_dimension_numbers<[1], [0], [0], [1], [0, 0, 1, 1], [], []>} : vector<8x10xf32>, vector<10x20xf32>, vector<8x20xf32> -> vector<8x20xf32>
    %c0_15 = arith.constant 0 : index
    %c0_16 = arith.constant 0 : index
    %23 = vector.load %arg7[%c0_15, %c0_16] : memref<1x20xf32, #tpu.memory_space<vmem>>, vector<1x20xf32>
    %24 = vector.broadcast %23 : vector<1x20xf32> to vector<8x20xf32>
    %25 = arith.addf %22, %24 : vector<8x20xf32>
    %26 = arith.negf %25 : vector<8x20xf32>
    %27 = math.exp %26 : vector<8x20xf32>
    %cst_17 = arith.constant 1.000000e+00 : f32
    %28 = vector.broadcast %cst_17 : f32 to vector<8x20xf32>
    %29 = arith.addf %28, %27 : vector<8x20xf32>
    %30 = arith.divf %28, %29 : vector<8x20xf32>
    %c0_18 = arith.constant 0 : index
    %c0_19 = arith.constant 0 : index
    %31 = vector.load %arg8[%c0_18, %c0_19] : memref<20x256xf32, #tpu.memory_space<vmem>>, vector<20x256xf32>
    %cst_20 = arith.constant dense<0.000000e+00> : vector<8x256xf32>
    %32 = tpu.matmul %30, %31, %cst_20 {dimension_numbers = #tpu.dot_dimension_numbers<[1], [0], [0], [1], [0, 0, 1, 1], [], []>} : vector<8x20xf32>, vector<20x256xf32>, vector<8x256xf32> -> vector<8x256xf32>
    %c0_21 = arith.constant 0 : index
    %c0_22 = arith.constant 0 : index
    %33 = vector.load %arg9[%c0_21, %c0_22] : memref<1x256xf32, #tpu.memory_space<vmem>>, vector<1x256xf32>
    %34 = vector.broadcast %33 : vector<1x256xf32> to vector<8x256xf32>
    %35 = arith.addf %32, %34 : vector<8x256xf32>
    %c0_23 = arith.constant 0 : index
    %c0_24 = arith.constant 0 : index
    %36 = vector.load %arg10[%c0_23, %c0_24] : memref<8x256xf32, #tpu.memory_space<vmem>>, vector<8x256xf32>
    tpu.vector_store %arg10[%c0_23, %c0_24], %35 {strides = array<i32>} : memref<8x256xf32, #tpu.memory_space<vmem>>, vector<8x256xf32>,
    return
  }
  func.func @transform_0(%arg0: i32) -> (i32, i32) {
    %c0_i32 = arith.constant 0 : i32
    %c0_i32_0 = arith.constant 0 : i32
    return %arg0, %c0_i32 : i32, i32
  }
  func.func @transform_1(%arg0: i32) -> (i32, i32) {
    %c0_i32 = arith.constant 0 : i32
    %c0_i32_0 = arith.constant 0 : i32
    %c0_i32_1 = arith.constant 0 : i32
    return %c0_i32, %c0_i32_0 : i32, i32
  }
  func.func @transform_2(%arg0: i32) -> (i32, i32) {
    %c0_i32 = arith.constant 0 : i32
    %c0_i32_0 = arith.constant 0 : i32
    %c0_i32_1 = arith.constant 0 : i32
    return %c0_i32, %c0_i32_0 : i32, i32
  }
  func.func @transform_3(%arg0: i32) -> (i32, i32) {
    %c0_i32 = arith.constant 0 : i32
    %c0_i32_0 = arith.constant 0 : i32
    %c0_i32_1 = arith.constant 0 : i32
    return %c0_i32, %c0_i32_0 : i32, i32
  }
  func.func @transform_4(%arg0: i32) -> (i32, i32) {
    %c0_i32 = arith.constant 0 : i32
    %c0_i32_0 = arith.constant 0 : i32
    %c0_i32_1 = arith.constant 0 : i32
    return %c0_i32, %c0_i32_0 : i32, i32
  }
  func.func @transform_5(%arg0: i32) -> (i32, i32) {
    %c0_i32 = arith.constant 0 : i32
    %c0_i32_0 = arith.constant 0 : i32
    %c0_i32_1 = arith.constant 0 : i32
    return %c0_i32, %c0_i32_0 : i32, i32
  }
  func.func @transform_6(%arg0: i32) -> (i32, i32) {
    %c0_i32 = arith.constant 0 : i32
    %c0_i32_0 = arith.constant 0 : i32
    %c0_i32_1 = arith.constant 0 : i32
    return %c0_i32, %c0_i32_0 : i32, i32
  }
  func.func @transform_7(%arg0: i32) -> (i32, i32) {
    %c0_i32 = arith.constant 0 : i32
    %c0_i32_0 = arith.constant 0 : i32
    %c0_i32_1 = arith.constant 0 : i32
    return %c0_i32, %c0_i32_0 : i32, i32
  }
  func.func @transform_8(%arg0: i32) -> (i32, i32) {
    %c0_i32 = arith.constant 0 : i32
    %c0_i32_0 = arith.constant 0 : i32
    %c0_i32_1 = arith.constant 0 : i32
    return %c0_i32, %c0_i32_0 : i32, i32
  }
  func.func @transform_9(%arg0: i32) -> (i32, i32) {
    %c0_i32 = arith.constant 0 : i32
    %c0_i32_0 = arith.constant 0 : i32
    return %arg0, %c0_i32 : i32, i32
  }
}

</mosaic_0001>

<llo_original>
// kernel: tpu_custom_call.1
$region0: #{tpu_custom_call.1}
  #allocation0 [shape = 'u32[]', space=smem, size = 0x4, offset = 0x4, fixed_abs, tag = 'smem constant byte address 0x4 - core index']
  #allocation1 [shape = 'u32[144,128]{1,0:T(1,128)}', space=vmem, size = 0x12000, scoped, tag = 'internal scratch']
  %s0 = inlined_call_operand.vmem [shape: f32[16,256], index: 0, kind: input, shape index: {}]
  %s1 = inlined_call_operand.vmem [shape: f32[256,20], index: 1, kind: input, shape index: {}]
  %s2 = inlined_call_operand.vmem [shape: f32[1,20], index: 2, kind: input, shape index: {}]
  %s3 = inlined_call_operand.vmem [shape: f32[20,10], index: 3, kind: input, shape index: {}]
  %s4 = inlined_call_operand.vmem [shape: f32[1,10], index: 4, kind: input, shape index: {}]
  %s5 = inlined_call_operand.vmem [shape: f32[10,20], index: 5, kind: input, shape index: {}]
  %s6 = inlined_call_operand.vmem [shape: f32[1,20], index: 6, kind: input, shape index: {}]
  %s7 = inlined_call_operand.vmem [shape: f32[20,256], index: 7, kind: input, shape index: {}]
  %s8 = inlined_call_operand.vmem [shape: f32[1,256], index: 8, kind: input, shape index: {}]
  %s9 = inlined_call_operand.hbm [shape: f32[16,256], index: 9, kind: output, shape index: {}]
  %s10 = sld [smem:[#allocation0]]
  $region69: #{tpu_custom_call.1} parent=0
    _
  %s12 = ssub.s32 1, %s10
  %s13 = scalar_select 0, %s12, %s10
  $region1: #{tpu_custom_call.1} parent=0
    #allocation2 [shape = 'u8[16384]{0}', space=vmem, size = 0x4000, scoped, tag = 'output window, operand 0']
    #allocation3 [shape = 's32[2]{0}', space=sflag, size = 0x8, scoped, tag = 'scoped memory for tpu_custom_call.1']
    %14 = vsyncpa [#allocation3], 0
    %s15 = scalar_lea.sflag [#allocation3], 1
    %16 = vsyncpa %s15, 0
    loop: start=0, step=1, limit=4
    $region2: #{tpu_custom_call.1} parent=1 // loop_pre_header
      _
    $region3: #{tpu_custom_call.1} parent=1 // loop_header
      %s18 = sphi 0, %s22
      %p19 = scmp.ge.s32.totalorder %s18, 4
      %s28 = sphi 0, %s30
      %s31 = sphi 0, %s28
      %s32 = sphi 0, %s31
      %s48 = sphi 0, %s32
      %s52 = sphi 0, %s52
      %s54 = sphi 0, %s52
      %s55 = sphi 0, %s54
      %s69 = sphi 0, %s55
      %s73 = sphi 0, %s73
      %s75 = sphi 0, %s73
      %s76 = sphi 0, %s75
      %s90 = sphi 0, %s76
      %s94 = sphi 0, %s94
      %s96 = sphi 0, %s94
      %s97 = sphi 0, %s96
      %s111 = sphi 0, %s97
      %s115 = sphi 0, %s115
      %s117 = sphi 0, %s115
      %s118 = sphi 0, %s117
      %s132 = sphi 0, %s118
      %s136 = sphi 0, %s136
      %s138 = sphi 0, %s136
      %s139 = sphi 0, %s138
      %s153 = sphi 0, %s139
      %s157 = sphi 0, %s157
      %s159 = sphi 0, %s157
      %s160 = sphi 0, %s159
      %s174 = sphi 0, %s160
      %s178 = sphi 0, %s178
      %s180 = sphi 0, %s178
      %s181 = sphi 0, %s180
      %s195 = sphi 0, %s181
      %s199 = sphi 0, %s199
      %s201 = sphi 0, %s199
      %s202 = sphi 0, %s201
      %s216 = sphi 0, %s202
      %s222 = sphi 0, %s224
      %s225 = sphi 0, %s222
      %s226 = sphi 0, %s225
      %s242 = sphi 0, %s226
    $region4: #{tpu_custom_call.1} parent=1 // loop_header_branch
      %21 = sbr.rel (%p19) target = $region8
    $region5: #{tpu_custom_call.1} parent=1 // loop_body
      %s23 = ssub.s32 %s18, 1
      %s24 = ssub.s32 %s18, 2
      %s25 = sadd.s32 %s18, 1
      %s26 = ssub.s32 %s18, %s25
      %p27 = scmp.eq.s32.totalorder %s26, 0
      %s29 = sadd.s32 %s28, 1
      %s30 = scalar_select %p27, %s28, %s29
      %p33 = pneg %p27
      %p34 = scmp.eq.s32.totalorder %s18, 1
      %p35 = por %p33, %p34
      %p36 = scmp.ne.s32.totalorder %s28, %s31
      %p37 = scmp.eq.s32.totalorder %s18, 0
      %p38 = por %p36, %p37
      %p39 = scmp.ne.s32.totalorder %s28, %s31
      %p40 = scmp.eq.s32.totalorder %s23, 1
      %p41 = por %p39, %p40
      %p42 = scmp.ne.s32.totalorder %s31, %s32
      %p43 = scmp.eq.s32.totalorder %s23, 0
      %p44 = por %p42, %p43
      %p45 = scmp.ne.s32.totalorder %s31, %s32
      %p46 = scmp.eq.s32.totalorder %s24, 1
      %p47 = por %p45, %p46
      %p49 = scmp.ne.s32.totalorder %s32, %s48
      %p50 = scmp.eq.s32.totalorder %s24, 0
      %p51 = por %p49, %p50
      %s53 = sadd.s32 %s52, 1
      %p56 = scmp.eq.s32.totalorder %s18, 1
      %p57 = scmp.ne.s32.totalorder %s52, %s54
      %p58 = scmp.eq.s32.totalorder %s18, 0
      %p59 = por %p57, %p58
      %p60 = scmp.ne.s32.totalorder %s52, %s54
      %p61 = scmp.eq.s32.totalorder %s23, 1
      %p62 = por %p60, %p61
      %p63 = scmp.ne.s32.totalorder %s54, %s55
      %p64 = scmp.eq.s32.totalorder %s23, 0
      %p65 = por %p63, %p64
      %p66 = scmp.ne.s32.totalorder %s54, %s55
      %p67 = scmp.eq.s32.totalorder %s24, 1
      %p68 = por %p66, %p67
      %p70 = scmp.ne.s32.totalorder %s55, %s69
      %p71 = scmp.eq.s32.totalorder %s24, 0
      %p72 = por %p70, %p71
      %s74 = sadd.s32 %s73, 1
      %p77 = scmp.eq.s32.totalorder %s18, 1
      %p78 = scmp.ne.s32.totalorder %s73, %s75
      %p79 = scmp.eq.s32.totalorder %s18, 0
      %p80 = por %p78, %p79
      %p81 = scmp.ne.s32.totalorder %s73, %s75
      %p82 = scmp.eq.s32.totalorder %s23, 1
      %p83 = por %p81, %p82
      %p84 = scmp.ne.s32.totalorder %s75, %s76
      %p85 = scmp.eq.s32.totalorder %s23, 0
      %p86 = por %p84, %p85
      %p87 = scmp.ne.s32.totalorder %s75, %s76
      %p88 = scmp.eq.s32.totalorder %s24, 1
      %p89 = por %p87, %p88
      %p91 = scmp.ne.s32.totalorder %s76, %s90
      %p92 = scmp.eq.s32.totalorder %s24, 0
      %p93 = por %p91, %p92
      %s95 = sadd.s32 %s94, 1
      %p98 = scmp.eq.s32.totalorder %s18, 1
      %p99 = scmp.ne.s32.totalorder %s94, %s96
      %p100 = scmp.eq.s32.totalorder %s18, 0
      %p101 = por %p99, %p100
      %p102 = scmp.ne.s32.totalorder %s94, %s96
      %p103 = scmp.eq.s32.totalorder %s23, 1
      %p104 = por %p102, %p103
      %p105 = scmp.ne.s32.totalorder %s96, %s97
      %p106 = scmp.eq.s32.totalorder %s23, 0
      %p107 = por %p105, %p106
      %p108 = scmp.ne.s32.totalorder %s96, %s97
      %p109 = scmp.eq.s32.totalorder %s24, 1
      %p110 = por %p108, %p109
      %p112 = scmp.ne.s32.totalorder %s97, %s111
      %p113 = scmp.eq.s32.totalorder %s24, 0
      %p114 = por %p112, %p113
      %s116 = sadd.s32 %s115, 1
      %p119 = scmp.eq.s32.totalorder %s18, 1
      %p120 = scmp.ne.s32.totalorder %s115, %s117
      %p121 = scmp.eq.s32.totalorder %s18, 0
      %p122 = por %p120, %p121
      %p123 = scmp.ne.s32.totalorder %s115, %s117
      %p124 = scmp.eq.s32.totalorder %s23, 1
      %p125 = por %p123, %p124
      %p126 = scmp.ne.s32.totalorder %s117, %s118
      %p127 = scmp.eq.s32.totalorder %s23, 0
      %p128 = por %p126, %p127
      %p129 = scmp.ne.s32.totalorder %s117, %s118
      %p130 = scmp.eq.s32.totalorder %s24, 1
      %p131 = por %p129, %p130
      %p133 = scmp.ne.s32.totalorder %s118, %s132
      %p134 = scmp.eq.s32.totalorder %s24, 0
      %p135 = por %p133, %p134
      %s137 = sadd.s32 %s136, 1
      %p140 = scmp.eq.s32.totalorder %s18, 1
      %p141 = scmp.ne.s32.totalorder %s136, %s138
      %p142 = scmp.eq.s32.totalorder %s18, 0
      %p143 = por %p141, %p142
      %p144 = scmp.ne.s32.totalorder %s136, %s138
      %p145 = scmp.eq.s32.totalorder %s23, 1
      %p146 = por %p144, %p145
      %p147 = scmp.ne.s32.totalorder %s138, %s139
      %p148 = scmp.eq.s32.totalorder %s23, 0
      %p149 = por %p147, %p148
      %p150 = scmp.ne.s32.totalorder %s138, %s139
      %p151 = scmp.eq.s32.totalorder %s24, 1
      %p152 = por %p150, %p151
      %p154 = scmp.ne.s32.totalorder %s139, %s153
      %p155 = scmp.eq.s32.totalorder %s24, 0
      %p156 = por %p154, %p155
      %s158 = sadd.s32 %s157, 1
      %p161 = scmp.eq.s32.totalorder %s18, 1
      %p162 = scmp.ne.s32.totalorder %s157, %s159
      %p163 = scmp.eq.s32.totalorder %s18, 0
      %p164 = por %p162, %p163
      %p165 = scmp.ne.s32.totalorder %s157, %s159
      %p166 = scmp.eq.s32.totalorder %s23, 1
      %p167 = por %p165, %p166
      %p168 = scmp.ne.s32.totalorder %s159, %s160
      %p169 = scmp.eq.s32.totalorder %s23, 0
      %p170 = por %p168, %p169
      %p171 = scmp.ne.s32.totalorder %s159, %s160
      %p172 = scmp.eq.s32.totalorder %s24, 1
      %p173 = por %p171, %p172
      %p175 = scmp.ne.s32.totalorder %s160, %s174
      %p176 = scmp.eq.s32.totalorder %s24, 0
      %p177 = por %p175, %p176
      %s179 = sadd.s32 %s178, 1
      %p182 = scmp.eq.s32.totalorder %s18, 1
      %p183 = scmp.ne.s32.totalorder %s178, %s180
      %p184 = scmp.eq.s32.totalorder %s18, 0
      %p185 = por %p183, %p184
      %p186 = scmp.ne.s32.totalorder %s178, %s180
      %p187 = scmp.eq.s32.totalorder %s23, 1
      %p188 = por %p186, %p187
      %p189 = scmp.ne.s32.totalorder %s180, %s181
      %p190 = scmp.eq.s32.totalorder %s23, 0
      %p191 = por %p189, %p190
      %p192 = scmp.ne.s32.totalorder %s180, %s181
      %p193 = scmp.eq.s32.totalorder %s24, 1
      %p194 = por %p192, %p193
      %p196 = scmp.ne.s32.totalorder %s181, %s195
      %p197 = scmp.eq.s32.totalorder %s24, 0
      %p198 = por %p196, %p197
      %s200 = sadd.s32 %s199, 1
      %p203 = scmp.eq.s32.totalorder %s18, 1
      %p204 = scmp.ne.s32.totalorder %s199, %s201
      %p205 = scmp.eq.s32.totalorder %s18, 0
      %p206 = por %p204, %p205
      %p207 = scmp.ne.s32.totalorder %s199, %s201
      %p208 = scmp.eq.s32.totalorder %s23, 1
      %p209 = por %p207, %p208
      %p210 = scmp.ne.s32.totalorder %s201, %s202
      %p211 = scmp.eq.s32.totalorder %s23, 0
      %p212 = por %p210, %p211
      %p213 = scmp.ne.s32.totalorder %s201, %s202
      %p214 = scmp.eq.s32.totalorder %s24, 1
      %p215 = por %p213, %p214
      %p217 = scmp.ne.s32.totalorder %s202, %s216
      %p218 = scmp.eq.s32.totalorder %s24, 0
      %p219 = por %p217, %p218
      %s220 = ssub.s32 %s18, %s25
      %p221 = scmp.eq.s32.totalorder %s220, 0
      %s223 = sadd.s32 %s222, 1
      %s224 = scalar_select %p221, %s222, %s223
      %p227 = pneg %p221
      %p228 = scmp.eq.s32.totalorder %s18, 1
      %p229 = por %p227, %p228
      %p230 = scmp.ne.s32.totalorder %s222, %s225
      %p231 = scmp.eq.s32.totalorder %s18, 0
      %p232 = por %p230, %p231
      %p233 = scmp.ne.s32.totalorder %s222, %s225
      %p234 = scmp.eq.s32.totalorder %s23, 1
      %p235 = por %p233, %p234
      %p236 = scmp.ne.s32.totalorder %s225, %s226
      %p237 = scmp.eq.s32.totalorder %s23, 0
      %p238 = por %p236, %p237
      %p239 = scmp.ne.s32.totalorder %s225, %s226
      %p240 = scmp.eq.s32.totalorder %s24, 1
      %p241 = por %p239, %p240
      %p243 = scmp.ne.s32.totalorder %s226, %s242
      %p244 = scmp.eq.s32.totalorder %s24, 0
      %p245 = por %p243, %p244
      %p246 = scmp.le.s32.totalorder 1, %s18
      %p247 = scmp.lt.s32.totalorder %s18, 3
      %p248 = pnand %p246, %p247
      %p249 = pneg %p248
      // Predicated region
      $region9: #{tpu_custom_call.1} parent=5 // pred_check
        _
      $region10: #{tpu_custom_call.1} parent=5 // pred_check_branch
        %251 = sbr.rel (%p248) target = $region12
      $region11: #{tpu_custom_call.1} parent=5 // pred_region
        %s252 = ssub.s32 %s18, 1
        // Predicated region
        $region13: #{tpu_custom_call.1} parent=11 // pred_check
          %p253 = pneg %p65
        $region14: #{tpu_custom_call.1} parent=11 // pred_check_branch
          %255 = sbr.rel (%p253) target = $region16
        $region15: #{tpu_custom_call.1} parent=11 // pred_region
          _
        $region16: #{tpu_custom_call.1} parent=11 // pred_fallthru
          _
        // Predicated region
        $region17: #{tpu_custom_call.1} parent=11 // pred_check
          %p256 = pneg %p86
        $region18: #{tpu_custom_call.1} parent=11 // pred_check_branch
          %258 = sbr.rel (%p256) target = $region20
        $region19: #{tpu_custom_call.1} parent=11 // pred_region
          _
        $region20: #{tpu_custom_call.1} parent=11 // pred_fallthru
          _
        // Predicated region
        $region21: #{tpu_custom_call.1} parent=11 // pred_check
          %p259 = pneg %p107
        $region22: #{tpu_custom_call.1} parent=11 // pred_check_branch
          %261 = sbr.rel (%p259) target = $region24
        $region23: #{tpu_custom_call.1} parent=11 // pred_region
          _
        $region24: #{tpu_custom_call.1} parent=11 // pred_fallthru
          _
        // Predicated region
        $region25: #{tpu_custom_call.1} parent=11 // pred_check
          %p262 = pneg %p128
        $region26: #{tpu_custom_call.1} parent=11 // pred_check_branch
          %264 = sbr.rel (%p262) target = $region28
        $region27: #{tpu_custom_call.1} parent=11 // pred_region
          _
        $region28: #{tpu_custom_call.1} parent=11 // pred_fallthru
          _
        // Predicated region
        $region29: #{tpu_custom_call.1} parent=11 // pred_check
          %p265 = pneg %p149
        $region30: #{tpu_custom_call.1} parent=11 // pred_check_branch
          %267 = sbr.rel (%p265) target = $region32
        $region31: #{tpu_custom_call.1} parent=11 // pred_region
          _
        $region32: #{tpu_custom_call.1} parent=11 // pred_fallthru
          _
        // Predicated region
        $region33: #{tpu_custom_call.1} parent=11 // pred_check
          %p268 = pneg %p170
        $region34: #{tpu_custom_call.1} parent=11 // pred_check_branch
          %270 = sbr.rel (%p268) target = $region36
        $region35: #{tpu_custom_call.1} parent=11 // pred_region
          _
        $region36: #{tpu_custom_call.1} parent=11 // pred_fallthru
          _
        // Predicated region
        $region37: #{tpu_custom_call.1} parent=11 // pred_check
          %p271 = pneg %p191
        $region38: #{tpu_custom_call.1} parent=11 // pred_check_branch
          %273 = sbr.rel (%p271) target = $region40
        $region39: #{tpu_custom_call.1} parent=11 // pred_region
          _
        $region40: #{tpu_custom_call.1} parent=11 // pred_fallthru
          _
        // Predicated region
        $region41: #{tpu_custom_call.1} parent=11 // pred_check
          %p274 = pneg %p212
        $region42: #{tpu_custom_call.1} parent=11 // pred_check_branch
          %276 = sbr.rel (%p274) target = $region44
        $region43: #{tpu_custom_call.1} parent=11 // pred_region
          _
        $region44: #{tpu_custom_call.1} parent=11 // pred_fallthru
          _
      $region12: #{tpu_custom_call.1} parent=5 // pred_fallthru
        _
      %p277 = scmp.lt.s32.totalorder %s18, 2
      // Predicated region
      $region45: #{tpu_custom_call.1} parent=5 // pred_check
        %p278 = pneg %p277
      $region46: #{tpu_custom_call.1} parent=5 // pred_check_branch
        %280 = sbr.rel (%p278) target = $region48
      $region47: #{tpu_custom_call.1} parent=5 // pred_region
        // Predicated region
        $region49: #{tpu_custom_call.1} parent=47 // pred_check
          %p281 = pneg %p38
        $region50: #{tpu_custom_call.1} parent=47 // pred_check_branch
          %283 = sbr.rel (%p281) target = $region52
        $region51: #{tpu_custom_call.1} parent=47 // pred_region
          %p284 = scmp.lt.s32.totalorder %s18, 1
          %s285 = scalar_select %p284, %s18, 1
          %s286 = smul.addr %s285, 2
          %s287 = smul.addr %s286, 8
          %s288 = scalar_lea.vmem %s0, %s287
        $region52: #{tpu_custom_call.1} parent=47 // pred_fallthru
          _
      $region48: #{tpu_custom_call.1} parent=5 // pred_fallthru
        _
      %p289 = scmp.le.s32.totalorder 1, %s18
      %p290 = scmp.lt.s32.totalorder %s18, 3
      %p291 = pnand %p289, %p290
      %p292 = pneg %p291
      // Predicated region
      $region53: #{tpu_custom_call.1} parent=5 // pred_check
        _
      $region54: #{tpu_custom_call.1} parent=5 // pred_check_branch
        %294 = sbr.rel (%p291) target = $region56
      $region55: #{tpu_custom_call.1} parent=5 // pred_region
        %s295 = ssub.s32 %s18, 1
        %p296 = scmp.lt.s32.totalorder %s23, 1
        %s297 = scalar_select %p296, %s23, 1
        %s298 = smul.addr %s297, 2
        %s299 = smul.addr %s298, 8
        %s300 = scalar_lea.vmem %s0, %s299
        %p301 = pneg %p44
        %p302 = pneg %p41
        %p303 = pneg %p65
        %p304 = pneg %p62
        %p305 = pneg %p86
        %p306 = pneg %p83
        %p307 = pneg %p107
        %p308 = pneg %p104
        %p309 = pneg %p128
        %p310 = pneg %p125
        %p311 = pneg %p149
        %p312 = pneg %p146
        %p313 = pneg %p170
        %p314 = pneg %p167
        %p315 = pneg %p191
        %p316 = pneg %p188
        %p317 = pneg %p212
        %p318 = pneg %p209
        %p319 = pneg %p238
        %p320 = pneg %p235
        %s321 = sand.u32 %s225, 1
        %s322 = scalar_lea.sflag [#allocation3], %s321
        %s323 = sand.u32 %s225, 1
        %s324 = smul.addr %s323, 16
        %s325 = scalar_lea.vmem [#allocation2], %s324
        %p326 = scmp.lt.s32.totalorder %s23, 1
        %s327 = scalar_select %p326, %s23, 1
        %s328 = smul.addr %s327, 2
        %s329 = smul.addr %s328, 8
        %s330 = scalar_lea.vmem %s0, %s329
        %v331 = vld [vmem:[%s330] sm:$0xff]
        %v332 = vld [vmem:[%s330 + $0x8] sm:$0xff]
        %v333 = vld [vmem:[%s1] sm:$0xff]
        %v334 = vld [vmem:[%s1 + $0x8] sm:$0xff]
        %v335 = vld [vmem:[%s1 + $0x10] sm:$0xff]
        %v336 = vld [vmem:[%s1 + $0x18] sm:$0xff]
        %v337 = vld [vmem:[%s1 + $0x20] sm:$0xff]
        %v338 = vld [vmem:[%s1 + $0x28] sm:$0xff]
        %v339 = vld [vmem:[%s1 + $0x30] sm:$0xff]
        %v340 = vld [vmem:[%s1 + $0x38] sm:$0xff]
        %v341 = vld [vmem:[%s1 + $0x40] sm:$0xff]
        %v342 = vld [vmem:[%s1 + $0x48] sm:$0xff]
        %v343 = vld [vmem:[%s1 + $0x50] sm:$0xff]
        %v344 = vld [vmem:[%s1 + $0x58] sm:$0xff]
        %v345 = vld [vmem:[%s1 + $0x60] sm:$0xff]
        %v346 = vld [vmem:[%s1 + $0x68] sm:$0xff]
        %v347 = vld [vmem:[%s1 + $0x70] sm:$0xff]
        %v348 = vld [vmem:[%s1 + $0x78] sm:$0xff]
        %v349 = vld [vmem:[%s1 + $0x80] sm:$0xff]
        %v350 = vld [vmem:[%s1 + $0x88] sm:$0xff]
        %v351 = vld [vmem:[%s1 + $0x90] sm:$0xff]
        %v352 = vld [vmem:[%s1 + $0x98] sm:$0xff]
        %v353 = vld [vmem:[%s1 + $0xa0] sm:$0xff]
        %v354 = vld [vmem:[%s1 + $0xa8] sm:$0xff]
        %v355 = vld [vmem:[%s1 + $0xb0] sm:$0xff]
        %v356 = vld [vmem:[%s1 + $0xb8] sm:$0xff]
        %v357 = vld [vmem:[%s1 + $0xc0] sm:$0xff]
        %v358 = vld [vmem:[%s1 + $0xc8] sm:$0xff]
        %v359 = vld [vmem:[%s1 + $0xd0] sm:$0xff]
        %v360 = vld [vmem:[%s1 + $0xd8] sm:$0xff]
        %v361 = vld [vmem:[%s1 + $0xe0] sm:$0xff]
        %v362 = vld [vmem:[%s1 + $0xe8] sm:$0xff]
        %v363 = vld [vmem:[%s1 + $0xf0] sm:$0xff]
        %v364 = vld [vmem:[%s1 + $0xf8] sm:$0xff]
        %v365 = vld [vmem:[%s2] sm:$0x1]
        %v367 = vlaneseq
        %v368 = vshrl.u32 %v367, 7
        %v369 = vsub.s32 0, %v368
        %v370 = vrot.slane %v365, %v369
        %372 = vmatprep.subr.mxu0 0.0
        %373 = vmatpush1.msra.mxu0 %v333
        %374 = vmatprep.subr.mxu0 0.0
        %375 = vmatpush1.msra.mxu0 %v334
        %376 = vmatprep.subr.mxu0 0.0
        %377 = vmatpush1.msra.mxu0 %v335
        %378 = vmatprep.subr.mxu0 0.0
        %379 = vmatpush1.msra.mxu0 %v336
        %380 = vmatprep.subr.mxu0 0.0
        %381 = vmatpush1.msra.mxu0 %v337
        %382 = vmatprep.subr.mxu0 0.0
        %383 = vmatpush1.msra.mxu0 %v338
        %384 = vmatprep.subr.mxu0 0.0
        %385 = vmatpush1.msra.mxu0 %v339
        %386 = vmatprep.subr.mxu0 0.0
        %387 = vmatpush1.msra.mxu0 %v340
        %388 = vmatprep.subr.mxu0 0.0
        %389 = vmatpush1.msra.mxu0 %v341
        %390 = vmatprep.subr.mxu0 0.0
        %391 = vmatpush1.msra.mxu0 %v342
        %392 = vmatprep.subr.mxu0 0.0
        %393 = vmatpush1.msra.mxu0 %v343
        %394 = vmatprep.subr.mxu0 0.0
        %395 = vmatpush1.msra.mxu0 %v344
        %396 = vmatprep.subr.mxu0 0.0
        %397 = vmatpush1.msra.mxu0 %v345
        %398 = vmatprep.subr.mxu0 0.0
        %399 = vmatpush1.msra.mxu0 %v346
        %400 = vmatprep.subr.mxu0 0.0
        %401 = vmatpush1.msra.mxu0 %v347
        %402 = vmatprep.subr.mxu0 0.0
        %403 = vmatpush1.msra.mxu0 %v348
        %404 = vmatprep.subr.mxu0 0.0
        %405 = vmatpush1.msra.mxu0 %v349
        %406 = vmatprep.subr.mxu0 0.0
        %407 = vmatpush1.msra.mxu0 %v350
        %408 = vmatprep.subr.mxu0 0.0
        %409 = vmatpush1.msra.mxu0 %v351
        %410 = vmatprep.subr.mxu0 0.0
        %411 = vmatpush1.msra.mxu0 %v352
        %412 = vmatprep.subr.mxu0 0.0
        %413 = vmatpush1.msra.mxu0 %v353
        %414 = vmatprep.subr.mxu0 0.0
        %415 = vmatpush1.msra.mxu0 %v354
        %416 = vmatprep.subr.mxu0 0.0
        %417 = vmatpush1.msra.mxu0 %v355
        %418 = vmatprep.subr.mxu0 0.0
        %419 = vmatpush1.msra.mxu0 %v356
        %420 = vmatprep.subr.mxu0 0.0
        %421 = vmatpush1.msra.mxu0 %v357
        %422 = vmatprep.subr.mxu0 0.0
        %423 = vmatpush1.msra.mxu0 %v358
        %424 = vmatprep.subr.mxu0 0.0
        %425 = vmatpush1.msra.mxu0 %v359
        %426 = vmatprep.subr.mxu0 0.0
        %427 = vmatpush1.msra.mxu0 %v360
        %428 = vmatprep.subr.mxu0 0.0
        %429 = vmatpush1.msra.mxu0 %v361
        %430 = vmatprep.subr.mxu0 0.0
        %431 = vmatpush1.msra.mxu0 %v362
        %432 = vmatprep.subr.mxu0 0.0
        %433 = vmatpush1.msra.mxu0 %v363
        %434 = vmatprep.subr.mxu0 0.0
        %435 = vmatpush1.msra.mxu0 %v364
        %436 = vmatprep.mubr.f32.mxu0 %v332
        %437 = vmatmul.mubr.f32.gmra.mrb[0].mxu0 %v331
        %v438 = vpop.f32.mrb[0].mxu0
        %v439 = vadd.f32 %v370, %v438
        %v440 = vpop.f32.mrb[0].mxu0
        %441 = vdwg.mxu0
        %v442 = vxor.u32 %v439, 2147483648
        %v443 = vmul.f32 %v442, 1.442695
        %v444 = vpow.pop %v443
        %v445 = vadd.f32 %v444, 1.0
        %v446 = vrcp.pop %v445
        %v447 = vmul.f32 1.0, %v446
        %v448 = vld [vmem:[%s3] sm:$0xff]
        %v449 = vld [vmem:[%s3 + $0x8] sm:$0xff]
        %v450 = vld [vmem:[%s3 + $0x10] sm:$0xf]
        %v451 = vld [vmem:[%s4] sm:$0x1]
        %v453 = vlaneseq
        %v454 = vshrl.u32 %v453, 7
        %v455 = vsub.s32 0, %v454
        %v456 = vrot.slane %v451, %v455
        %vm458 = vcmask 162816
        %v460 = vsel %vm458, %v447, 0
        %vm462 = vcmask 1043456
        %v464 = vsel %vm462, %v450, 0
        %466 = vmatprep.subr.mxu0 0.0
        %467 = vmatpush1.msra.mxu0 %v448
        %468 = vmatprep.subr.mxu0 0.0
        %469 = vmatpush1.msra.mxu0 %v449
        %470 = vmatprep.subr.mxu0 0.0
        %471 = vmatpush1.msra.mxu0 %v464
        %472 = vmatprep.subr.mxu0 0.0
        %473 = vmatpush1.msra.mxu0 0.0
        %474 = vmatprep.subr.mxu0 0.0
        %475 = vmatpush1.msra.mxu0 0.0
        %476 = vmatprep.subr.mxu0 0.0
        %477 = vmatpush1.msra.mxu0 0.0
        %478 = vmatprep.subr.mxu0 0.0
        %479 = vmatpush1.msra.mxu0 0.0
        %480 = vmatprep.subr.mxu0 0.0
        %481 = vmatpush1.msra.mxu0 0.0
        %482 = vmatprep.subr.mxu0 0.0
        %483 = vmatpush1.msra.mxu0 0.0
        %484 = vmatprep.subr.mxu0 0.0
        %485 = vmatpush1.msra.mxu0 0.0
        %486 = vmatprep.subr.mxu0 0.0
        %487 = vmatpush1.msra.mxu0 0.0
        %488 = vmatprep.subr.mxu0 0.0
        %489 = vmatpush1.msra.mxu0 0.0
        %490 = vmatprep.subr.mxu0 0.0
        %491 = vmatpush1.msra.mxu0 0.0
        %492 = vmatprep.subr.mxu0 0.0
        %493 = vmatpush1.msra.mxu0 0.0
        %494 = vmatprep.subr.mxu0 0.0
        %495 = vmatpush1.msra.mxu0 0.0
        %496 = vmatprep.subr.mxu0 0.0
        %497 = vmatpush1.msra.mxu0 0.0
        %498 = vmatprep.subr.mxu0 0.0
        %499 = vmatpush1.msra.mxu0 0.0
        %500 = vmatprep.subr.mxu0 0.0
        %501 = vmatpush1.msra.mxu0 0.0
        %502 = vmatprep.subr.mxu0 0.0
        %503 = vmatpush1.msra.mxu0 0.0
        %504 = vmatprep.subr.mxu0 0.0
        %505 = vmatpush1.msra.mxu0 0.0
        %506 = vmatprep.subr.mxu0 0.0
        %507 = vmatpush1.msra.mxu0 0.0
        %508 = vmatprep.subr.mxu0 0.0
        %509 = vmatpush1.msra.mxu0 0.0
        %510 = vmatprep.subr.mxu0 0.0
        %511 = vmatpush1.msra.mxu0 0.0
        %512 = vmatprep.subr.mxu0 0.0
        %513 = vmatpush1.msra.mxu0 0.0
        %514 = vmatprep.subr.mxu0 0.0
        %515 = vmatpush1.msra.mxu0 0.0
        %516 = vmatprep.subr.mxu0 0.0
        %517 = vmatpush1.msra.mxu0 0.0
        %518 = vmatprep.subr.mxu0 0.0
        %519 = vmatpush1.msra.mxu0 0.0
        %520 = vmatprep.subr.mxu0 0.0
        %521 = vmatpush1.msra.mxu0 0.0
        %522 = vmatprep.subr.mxu0 0.0
        %523 = vmatpush1.msra.mxu0 0.0
        %524 = vmatprep.subr.mxu0 0.0
        %525 = vmatpush1.msra.mxu0 0.0
        %526 = vmatprep.subr.mxu0 0.0
        %527 = vmatpush1.msra.mxu0 0.0
        %528 = vmatprep.subr.mxu0 0.0
        %529 = vmatpush1.msra.mxu0 0.0
        %530 = vmatprep.mubr.f32.mxu0 0.0
        %531 = vmatmul.mubr.f32.gmra.mrb[0].mxu0 %v460
        %v532 = vpop.f32.mrb[0].mxu0
        %v533 = vadd.f32 %v456, %v532
        %v534 = vpop.f32.mrb[0].mxu0
        %535 = vdwg.mxu0
        %v536 = vxor.u32 %v533, 2147483648
        %v537 = vmul.f32 %v536, 1.442695
        %v538 = vpow.pop %v537
        %v539 = vadd.f32 %v538, 1.0
        %v540 = vrcp.pop %v539
        %v541 = vmul.f32 1.0, %v540
        %v542 = vld [vmem:[%s5] sm:$0xff]
        %v543 = vld [vmem:[%s5 + $0x8] sm:$0x3]
        %v544 = vld [vmem:[%s6] sm:$0x1]
        %v546 = vlaneseq
        %v547 = vshrl.u32 %v546, 7
        %v548 = vsub.s32 0, %v547
        %v549 = vrot.slane %v544, %v548
        %vm551 = vcmask 80896
        %v553 = vsel %vm551, %v541, 0
        %vm555 = vcmask 1041408
        %v557 = vsel %vm555, %v543, 0
        %559 = vmatprep.subr.mxu0 0.0
        %560 = vmatpush1.msra.mxu0 %v542
        %561 = vmatprep.subr.mxu0 0.0
        %562 = vmatpush1.msra.mxu0 %v557
        %563 = vmatprep.subr.mxu0 0.0
        %564 = vmatpush1.msra.mxu0 0.0
        %565 = vmatprep.subr.mxu0 0.0
        %566 = vmatpush1.msra.mxu0 0.0
        %567 = vmatprep.subr.mxu0 0.0
        %568 = vmatpush1.msra.mxu0 0.0
        %569 = vmatprep.subr.mxu0 0.0
        %570 = vmatpush1.msra.mxu0 0.0
        %571 = vmatprep.subr.mxu0 0.0
        %572 = vmatpush1.msra.mxu0 0.0
        %573 = vmatprep.subr.mxu0 0.0
        %574 = vmatpush1.msra.mxu0 0.0
        %575 = vmatprep.subr.mxu0 0.0
        %576 = vmatpush1.msra.mxu0 0.0
        %577 = vmatprep.subr.mxu0 0.0
        %578 = vmatpush1.msra.mxu0 0.0
        %579 = vmatprep.subr.mxu0 0.0
        %580 = vmatpush1.msra.mxu0 0.0
        %581 = vmatprep.subr.mxu0 0.0
        %582 = vmatpush1.msra.mxu0 0.0
        %583 = vmatprep.subr.mxu0 0.0
        %584 = vmatpush1.msra.mxu0 0.0
        %585 = vmatprep.subr.mxu0 0.0
        %586 = vmatpush1.msra.mxu0 0.0
        %587 = vmatprep.subr.mxu0 0.0
        %588 = vmatpush1.msra.mxu0 0.0
        %589 = vmatprep.subr.mxu0 0.0
        %590 = vmatpush1.msra.mxu0 0.0
        %591 = vmatprep.subr.mxu0 0.0
        %592 = vmatpush1.msra.mxu0 0.0
        %593 = vmatprep.subr.mxu0 0.0
        %594 = vmatpush1.msra.mxu0 0.0
        %595 = vmatprep.subr.mxu0 0.0
        %596 = vmatpush1.msra.mxu0 0.0
        %597 = vmatprep.subr.mxu0 0.0
        %598 = vmatpush1.msra.mxu0 0.0
        %599 = vmatprep.subr.mxu0 0.0
        %600 = vmatpush1.msra.mxu0 0.0
        %601 = vmatprep.subr.mxu0 0.0
        %602 = vmatpush1.msra.mxu0 0.0
        %603 = vmatprep.subr.mxu0 0.0
        %604 = vmatpush1.msra.mxu0 0.0
        %605 = vmatprep.subr.mxu0 0.0
        %606 = vmatpush1.msra.mxu0 0.0
        %607 = vmatprep.subr.mxu0 0.0
        %608 = vmatpush1.msra.mxu0 0.0
        %609 = vmatprep.subr.mxu0 0.0
        %610 = vmatpush1.msra.mxu0 0.0
        %611 = vmatprep.subr.mxu0 0.0
        %612 = vmatpush1.msra.mxu0 0.0
        %613 = vmatprep.subr.mxu0 0.0
        %614 = vmatpush1.msra.mxu0 0.0
        %615 = vmatprep.subr.mxu0 0.0
        %616 = vmatpush1.msra.mxu0 0.0
        %617 = vmatprep.subr.mxu0 0.0
        %618 = vmatpush1.msra.mxu0 0.0
        %619 = vmatprep.subr.mxu0 0.0
        %620 = vmatpush1.msra.mxu0 0.0
        %621 = vmatprep.subr.mxu0 0.0
        %622 = vmatpush1.msra.mxu0 0.0
        %623 = vmatprep.mubr.f32.mxu0 0.0
        %624 = vmatmul.mubr.f32.gmra.mrb[0].mxu0 %v553
        %v625 = vpop.f32.mrb[0].mxu0
        %v626 = vadd.f32 %v549, %v625
        %v627 = vpop.f32.mrb[0].mxu0
        %628 = vdwg.mxu0
        %v629 = vxor.u32 %v626, 2147483648
        %v630 = vmul.f32 %v629, 1.442695
        %v631 = vpow.pop %v630
        %v632 = vadd.f32 %v631, 1.0
        %v633 = vrcp.pop %v632
        %v634 = vmul.f32 1.0, %v633
        %v635 = vld [vmem:[%s7] sm:$0xff]
        %v636 = vld [vmem:[%s7 + $0x8] sm:$0xff]
        %v637 = vld [vmem:[%s7 + $0x10] sm:$0xff]
        %v638 = vld [vmem:[%s7 + $0x18] sm:$0xff]
        %v639 = vld [vmem:[%s7 + $0x20] sm:$0xf]
        %v640 = vld [vmem:[%s7 + $0x28] sm:$0xf]
        %v641 = vld [vmem:[%s8] sm:$0x3]
        %v643 = vlaneseq
        %v644 = vshrl.u32 %v643, 7
        %v645 = vsub.s32 0, %v644
        %v646 = vrot.slane %v641, %v645
        %v647 = vlaneseq
        %v648 = vshrl.u32 %v647, 7
        %v649 = vsub.s32 1, %v648
        %v650 = vrot.slane %v641, %v649
        %v654 = vsel %vm458, %v634, 0
        %v657 = vsel %vm462, %v639, 0
        %v660 = vsel %vm462, %v640, 0
        %662 = vmatprep.subr.mxu0 %v636
        %663 = vmatpush1.msra.mxu0 %v635
        %664 = vmatprep.subr.mxu0 %v638
        %665 = vmatpush1.msra.mxu0 %v637
        %666 = vmatprep.subr.mxu0 %v660
        %667 = vmatpush1.msra.mxu0 %v657
        %668 = vmatprep.subr.mxu0 0.0
        %669 = vmatpush1.msra.mxu0 0.0
        %670 = vmatprep.subr.mxu0 0.0
        %671 = vmatpush1.msra.mxu0 0.0
        %672 = vmatprep.subr.mxu0 0.0
        %673 = vmatpush1.msra.mxu0 0.0
        %674 = vmatprep.subr.mxu0 0.0
        %675 = vmatpush1.msra.mxu0 0.0
        %676 = vmatprep.subr.mxu0 0.0
        %677 = vmatpush1.msra.mxu0 0.0
        %678 = vmatprep.subr.mxu0 0.0
        %679 = vmatpush1.msra.mxu0 0.0
        %680 = vmatprep.subr.mxu0 0.0
        %681 = vmatpush1.msra.mxu0 0.0
        %682 = vmatprep.subr.mxu0 0.0
        %683 = vmatpush1.msra.mxu0 0.0
        %684 = vmatprep.subr.mxu0 0.0
        %685 = vmatpush1.msra.mxu0 0.0
        %686 = vmatprep.subr.mxu0 0.0
        %687 = vmatpush1.msra.mxu0 0.0
        %688 = vmatprep.subr.mxu0 0.0
        %689 = vmatpush1.msra.mxu0 0.0
        %690 = vmatprep.subr.mxu0 0.0
        %691 = vmatpush1.msra.mxu0 0.0
        %692 = vmatprep.subr.mxu0 0.0
        %693 = vmatpush1.msra.mxu0 0.0
        %694 = vmatprep.subr.mxu0 0.0
        %695 = vmatpush1.msra.mxu0 0.0
        %696 = vmatprep.subr.mxu0 0.0
        %697 = vmatpush1.msra.mxu0 0.0
        %698 = vmatprep.subr.mxu0 0.0
        %699 = vmatpush1.msra.mxu0 0.0
        %700 = vmatprep.subr.mxu0 0.0
        %701 = vmatpush1.msra.mxu0 0.0
        %702 = vmatprep.subr.mxu0 0.0
        %703 = vmatpush1.msra.mxu0 0.0
        %704 = vmatprep.subr.mxu0 0.0
        %705 = vmatpush1.msra.mxu0 0.0
        %706 = vmatprep.subr.mxu0 0.0
        %707 = vmatpush1.msra.mxu0 0.0
        %708 = vmatprep.subr.mxu0 0.0
        %709 = vmatpush1.msra.mxu0 0.0
        %710 = vmatprep.subr.mxu0 0.0
        %711 = vmatpush1.msra.mxu0 0.0
        %712 = vmatprep.subr.mxu0 0.0
        %713 = vmatpush1.msra.mxu0 0.0
        %714 = vmatprep.subr.mxu0 0.0
        %715 = vmatpush1.msra.mxu0 0.0
        %716 = vmatprep.subr.mxu0 0.0
        %717 = vmatpush1.msra.mxu0 0.0
        %718 = vmatprep.subr.mxu0 0.0
        %719 = vmatpush1.msra.mxu0 0.0
        %720 = vmatprep.subr.mxu0 0.0
        %721 = vmatpush1.msra.mxu0 0.0
        %722 = vmatprep.subr.mxu0 0.0
        %723 = vmatpush1.msra.mxu0 0.0
        %724 = vmatprep.subr.mxu0 0.0
        %725 = vmatpush1.msra.mxu0 0.0
        %726 = vmatprep.mubr.f32.mxu0 0.0
        %727 = vmatmul.mubr.f32.gmra.mrb[0].mxu0 %v654
        %v728 = vpop.f32.mrb[0].mxu0
        %v729 = vadd.f32 %v646, %v728
        %v730 = vpop.f32.mrb[0].mxu0
        %v731 = vadd.f32 %v650, %v730
        %732 = vdwg.mxu0
        %733 = vst [vmem:[%s325] sm:$0xff] %v729
        %734 = vst [vmem:[%s325 + $0x8] sm:$0xff] %v731
        %s735 = sand.u32 %s225, 1
        %s736 = scalar_lea.sflag [#allocation3], %s735
        %s737 = sand.u32 %s225, 1
        %s738 = smul.addr %s737, 16
        %s739 = scalar_lea.vmem [#allocation2], %s738
        // Predicated region
        $region57: #{tpu_custom_call.1} parent=55 // pred_check
          %p740 = pneg %p235
        $region58: #{tpu_custom_call.1} parent=55 // pred_check_branch
          %742 = sbr.rel (%p740) target = $region60
        $region59: #{tpu_custom_call.1} parent=55 // pred_region
          %s744 = ssub.s32 256, 256
          %745 = vsyncadd %s736, %s744
          %s746 = smul.addr %s23, 2
          %s747 = smul.addr %s746, 128
          %s748 = scalar_lea.hbm %s9, %s747
          %s750 = sshll.u32 %s739, 4
          %s751 = int_to_ptr.vmem [resolvable:$true] %s750
          %753 = dma.vmem_to_hbm [thread:$0]  %s751, 256, %s748, %s736
        $region60: #{tpu_custom_call.1} parent=55 // pred_fallthru
          _
      $region56: #{tpu_custom_call.1} parent=5 // pred_fallthru
        _
      %p754 = scmp.le.s32.totalorder 2, %s18
      // Predicated region
      $region61: #{tpu_custom_call.1} parent=5 // pred_check
        %p755 = pneg %p754
      $region62: #{tpu_custom_call.1} parent=5 // pred_check_branch
        %757 = sbr.rel (%p755) target = $region64
      $region63: #{tpu_custom_call.1} parent=5 // pred_region
        %s758 = ssub.s32 %s18, 2
        // Predicated region
        $region65: #{tpu_custom_call.1} parent=63 // pred_check
          %p759 = pneg %p241
        $region66: #{tpu_custom_call.1} parent=63 // pred_check_branch
          %761 = sbr.rel (%p759) target = $region68
        $region67: #{tpu_custom_call.1} parent=63 // pred_region
          %s762 = sand.u32 %s226, 1
          %s763 = scalar_lea.sflag [#allocation3], %s762
          %s764 = sand.u32 %s226, 1
          %s765 = smul.addr %s764, 16
          %s766 = scalar_lea.vmem [#allocation2], %s765
          %767 = dma.done %s763, 256
        $region68: #{tpu_custom_call.1} parent=63 // pred_fallthru
          _
      $region64: #{tpu_custom_call.1} parent=5 // pred_fallthru
        _
    $region6: #{tpu_custom_call.1} parent=1 // loop_footer
      %s22 = sadd.s32 1, %s18
    $region7: #{tpu_custom_call.1} parent=1 // loop_footer_branch
      %17 = sbr.rel target = $region3
    $region8: #{tpu_custom_call.1} parent=1 // loop_exit
      _
    %768 = vsyncpa [#allocation3], 1
    %s769 = scalar_lea.sflag [#allocation3], 1
    %770 = vsyncpa %s769, 1

</llo_original>
